<compile_context>
chip_gen: v5e
topology: v5e:2x2
jax: 0.10.0
libtpu: 0.0.40
codegen_flags: <defaults>
</compile_context>

<pallas_src>
import math

import jax
import jax.numpy as jnp
from jax.experimental import pallas as pl
from jax.experimental.pallas import tpu as pltpu

# ------------------------- problem sizes (small, synthetic) ------------------
B = 2              # batch
P = 64             # number of BFM-like shape parameters (synthetic)
N_VERT = 128       # synthetic vertex count (>= 68 keypoints)
N_LMK = 68         # 68 facial landmarks (48 "left", 20 "mouth")
LMK_PAD = 128      # landmarks padded lane-dense 68 -> 128
IMG_SIZE = 224.0
FOV_DEG = 12.5936
EYE_Z = 10.0       # camera eye = (0, 0, 10), at origin, up = +y

# ----------------------- trace-time constants (no in-kernel divides) ---------
_S_NDC = 1.0 / math.tan(math.radians(FOV_DEG) / 2.0)   # FoV perspective scale
_PIX = (IMG_SIZE * 0.5) * _S_NDC                        # |d(pixel)| = _PIX * |d(ndc)|
_C = _PIX * _PIX
# loss = mean((mouth diff)^2) + 20*mean((left diff)^2), then /68
_W_MOUTH = _C / (float(B) * 20.0 * 2.0) / 68.0
_W_LEFT = 20.0 * _C / (float(B) * 48.0 * 2.0) / 68.0


# --------------------------- fused forward kernel ----------------------------
def _fused_landmark_loss_kernel(params_ref, basis_ref, mean_ref, out_ref):
    # One MXU matmul for pred+gt: (2B, P) @ (P, 3*128) + mean -> (2B, 3*128).
    v = (
        jnp.dot(params_ref[...], basis_ref[...], preferred_element_type=jnp.float32)
        + mean_ref[...]
    )
    # lane-dense coordinate blocks (static 128-aligned slices)
    x = v[:, 0 * LMK_PAD:1 * LMK_PAD]
    y = v[:, 1 * LMK_PAD:2 * LMK_PAD]
    z = v[:, 2 * LMK_PAD:3 * LMK_PAD]

    # look_at(eye=(0,0,10)) + FoV perspective:  x_ndc = s*(-x)/(10-z),
    # y_ndc = s*y/(10-z).  The sign flips and the pixel affine are identical
    # for pred and gt, so they are folded into the weights below.
    inv_z = pl.reciprocal(EYE_Z - z, approx=True)       # EUP slot
    nx = x * inv_z
    ny = y * inv_z

    dx = nx[0:B, :] - nx[B:2 * B, :]                    # pred rows - gt rows
    dy = ny[0:B, :] - ny[B:2 * B, :]
    sq = dx * dx + dy * dy                              # summed over xy coord axis

    # single weighted cross-lane reduction (mouth 48:68, left 0:48, pad = 0)
    lane = jax.lax.broadcasted_iota(jnp.int32, sq.shape, 1)
    w = jnp.where(lane < 48, _W_LEFT, jnp.where(lane < N_LMK, _W_MOUTH, 0.0))
    out_ref[0, 0] = jnp.sum(sq * w)


def _fused_landmark_loss(params, basis_lmk, mean_lmk):
    out = pl.pallas_call(
        _fused_landmark_loss_kernel,
        out_shape=jax.ShapeDtypeStruct((1, 1), jnp.float32),
        out_specs=pl.BlockSpec(memory_space=pltpu.MemorySpace.SMEM),
    )(params, basis_lmk, mean_lmk)
    return out[0, 0]


@jax.jit
def landmark_loss_forward(inp_param, gt_param, basis_lmk, mean_lmk):
    # stack pred/gt params into one (2B, P) LHS -> one matmul, one basis read
    params = jnp.concatenate([inp_param, gt_param], axis=0)
    return _fused_landmark_loss(params, basis_lmk, mean_lmk)


# ------------------ host-side (one-time) static keypoint baking --------------
def build_landmark_basis(basis, mean_shape, keypoints):
    """Pre-select landmark columns of the (P, 3*N_VERT) basis / mean.

    Output layout: (P, 3*128) = [x-block | y-block | z-block], each block
    lane-dense 128 wide, landmarks 0..67 real and 68..127 zero-padded.
    """
    cols_x = 3 * keypoints
    cols_y = 3 * keypoints + 1
    cols_z = 3 * keypoints + 2

    def pad(m):  # (rows, 68) -> (rows, 128)
        return jnp.pad(m, ((0, 0), (0, LMK_PAD - N_LMK)))

    basis_lmk = jnp.concatenate(
        [pad(basis[:, cols_x]), pad(basis[:, cols_y]), pad(basis[:, cols_z])], axis=1
    )
    mean_lmk = jnp.concatenate(
        [pad(mean_shape[:, cols_x]), pad(mean_shape[:, cols_y]), pad(mean_shape[:, cols_z])],
        axis=1,
    )
    return basis_lmk, mean_lmk


# ---------------------- pure-JAX reference (original math) -------------------
def reference_landmark_loss(inp_param, gt_param, basis, mean_shape, keypoints):
    def project(param):
        flat = param @ basis + mean_shape                 # (B, 3*N_VERT)
        verts = flat.reshape(B, N_VERT, 3)
        lmk = verts[:, keypoints, :]                      # (B, 68, 3)
        x, y, z = lmk[..., 0], lmk[..., 1], lmk[..., 2]
        xv, yv, zv = -x, y, EYE_Z - z
        xn = _S_NDC * xv / zv
        yn = _S_NDC * yv / zv
        xp = ((xn + 1.0) * IMG_SIZE - 1.0) * 0.5
        yp = ((yn + 1.0) * IMG_SIZE - 1.0) * 0.5
        return jnp.stack([IMG_SIZE - xp, IMG_SIZE - yp], axis=-1)  # (B, 68, 2)

    out = project(inp_param)   # prediction
    lab = project(gt_param)    # labels
    mouth = jnp.mean((out[:, 48:68] - lab[:, 48:68]) ** 2)
    left = jnp.mean((out[:, 0:48] - lab[:, 0:48]) ** 2)
    return (mouth + 20.0 * left) / 68.0


if __name__ == "__main__":
    key = jax.random.PRNGKey(0)
    k1, k2, k3, k4 = jax.random.split(key, 4)

    # deterministic "parameters" of the synthetic BFM
    basis = 0.01 * jax.random.normal(k3, (P, 3 * N_VERT), jnp.float32)
    mean_shape = 0.1 * jax.random.normal(k4, (1, 3 * N_VERT), jnp.float32)
    keypoints = (jnp.arange(N_LMK) * N_VERT) // N_LMK  # 68 distinct vertex ids (static)

    # example inputs
    inp_param = jax.random.normal(k1, (B, P), jnp.float32)
    gt_param = jax.random.normal(k2, (B, P), jnp.float32)

    # one-time host preprocessing: bake the static keypoint gather into the basis
    basis_lmk, mean_lmk = build_landmark_basis(basis, mean_shape, keypoints)

    loss = landmark_loss_forward(inp_param, gt_param, basis_lmk, mean_lmk)
    jax.block_until_ready(loss)

    ref = reference_landmark_loss(inp_param, gt_param, basis, mean_shape, keypoints)
    rel_err = jnp.abs(loss - ref) / jnp.maximum(jnp.abs(ref), 1e-6)

    assert loss.shape == () and jnp.isfinite(loss)
    assert rel_err < 2e-2, (float(loss), float(ref), float(rel_err))
    print("KERNEL_OK")
</pallas_src>

<mosaic_0001>
module attributes {stable_mosaic.version = 11 : i64} {
  func.func @_fused_landmark_loss_kernel(%arg0: memref<4x64xf32, #tpu.memory_space<vmem>>, %arg1: memref<64x384xf32, #tpu.memory_space<vmem>>, %arg2: memref<1x384xf32, #tpu.memory_space<vmem>>, %arg3: memref<1x1xf32, #tpu.memory_space<smem>>) attributes {dimension_semantics = [], scalar_prefetch = 0 : i64, scratch_operands = 0 : i64, tpu.core_type = #tpu.core_type<tc>} {
    %c0 = arith.constant 0 : index
    %c0_0 = arith.constant 0 : index
    %0 = vector.load %arg0[%c0, %c0_0] : memref<4x64xf32, #tpu.memory_space<vmem>>, vector<4x64xf32>
    %c0_1 = arith.constant 0 : index
    %c0_2 = arith.constant 0 : index
    %1 = vector.load %arg1[%c0_1, %c0_2] : memref<64x384xf32, #tpu.memory_space<vmem>>, vector<64x384xf32>
    %cst = arith.constant dense<0.000000e+00> : vector<4x384xf32>
    %2 = tpu.matmul %0, %1, %cst {dimension_numbers = #tpu.dot_dimension_numbers<[1], [0], [0], [1], [0, 0, 1, 1], [], []>} : vector<4x64xf32>, vector<64x384xf32>, vector<4x384xf32> -> vector<4x384xf32>
    %c0_3 = arith.constant 0 : index
    %c0_4 = arith.constant 0 : index
    %3 = vector.load %arg2[%c0_3, %c0_4] : memref<1x384xf32, #tpu.memory_space<vmem>>, vector<1x384xf32>
    %4 = vector.broadcast %3 : vector<1x384xf32> to vector<4x384xf32>
    %5 = arith.addf %2, %4 : vector<4x384xf32>
    %6 = vector.extract_strided_slice %5 {offsets = [0, 0], sizes = [4, 128], strides = [1, 1]} : vector<4x384xf32> to vector<4x128xf32>
    %7 = vector.extract_strided_slice %5 {offsets = [0, 128], sizes = [4, 128], strides = [1, 1]} : vector<4x384xf32> to vector<4x128xf32>
    %8 = vector.extract_strided_slice %5 {offsets = [0, 256], sizes = [4, 128], strides = [1, 1]} : vector<4x384xf32> to vector<4x128xf32>
    %cst_5 = arith.constant 1.000000e+01 : f32
    %9 = vector.broadcast %cst_5 : f32 to vector<4x128xf32>
    %10 = arith.subf %9, %8 : vector<4x128xf32>
    %11 = tpu.reciprocal %10 {approx = true} : vector<4x128xf32> -> vector<4x128xf32>
    %12 = arith.mulf %6, %11 : vector<4x128xf32>
    %13 = arith.mulf %7, %11 : vector<4x128xf32>
    %14 = vector.extract_strided_slice %12 {offsets = [0, 0], sizes = [2, 128], strides = [1, 1]} : vector<4x128xf32> to vector<2x128xf32>
    %15 = vector.extract_strided_slice %12 {offsets = [2, 0], sizes = [2, 128], strides = [1, 1]} : vector<4x128xf32> to vector<2x128xf32>
    %16 = arith.subf %14, %15 : vector<2x128xf32>
    %17 = vector.extract_strided_slice %13 {offsets = [0, 0], sizes = [2, 128], strides = [1, 1]} : vector<4x128xf32> to vector<2x128xf32>
    %18 = vector.extract_strided_slice %13 {offsets = [2, 0], sizes = [2, 128], strides = [1, 1]} : vector<4x128xf32> to vector<2x128xf32>
    %19 = arith.subf %17, %18 : vector<2x128xf32>
    %20 = arith.mulf %16, %16 : vector<2x128xf32>
    %21 = arith.mulf %19, %19 : vector<2x128xf32>
    %22 = arith.addf %20, %21 : vector<2x128xf32>
    %23 = tpu.iota {dimensions = array<i32: 1>} : vector<2x128xi32>
    %c48_i32 = arith.constant 48 : i32
    %24 = vector.broadcast %c48_i32 : i32 to vector<2x128xi32>
    %25 = arith.cmpi slt, %23, %24 : vector<2x128xi32>
    %c68_i32 = arith.constant 68 : i32
    %26 = vector.broadcast %c68_i32 : i32 to vector<2x128xi32>
    %27 = arith.cmpi slt, %23, %26 : vector<2x128xi32>
    %cst_6 = arith.constant 189.380737 : f32
    %cst_7 = arith.constant 0.000000e+00 : f32
    %28 = vector.broadcast %cst_6 : f32 to vector<2x128xf32>
    %29 = vector.broadcast %cst_7 : f32 to vector<2x128xf32>
    %30 = arith.select %27, %28, %29 : vector<2x128xi1>, vector<2x128xf32>
    %cst_8 = arith.constant 1578.17273 : f32
    %31 = vector.broadcast %cst_8 : f32 to vector<2x128xf32>
    %32 = arith.select %25, %31, %30 : vector<2x128xi1>, vector<2x128xf32>
    %33 = arith.mulf %22, %32 : vector<2x128xf32>
    %34 = vector.shape_cast %33 : vector<2x128xf32> to vector<1x2x128xf32>
    %cst_9 = arith.constant dense<0.000000e+00> : vector<1xf32>
    %35 = vector.multi_reduction <add>, %34, %cst_9 [1, 2] : vector<1x2x128xf32> to vector<1xf32>
    %36 = vector.shape_cast %35 : vector<1xf32> to vector<1x1x1xf32>
    %37 = vector.extract %36[0, 0, 0] : f32 from vector<1x1x1xf32>
    %c0_10 = arith.constant 0 : index
    %c0_11 = arith.constant 0 : index
    %38 = memref.load %arg3[%c0_10, %c0_11] : memref<1x1xf32, #tpu.memory_space<smem>>
    memref.store %37, %arg3[%c0_10, %c0_11] : memref<1x1xf32, #tpu.memory_space<smem>>
    return
  }
}

</mosaic_0001>

<llo_original>
// kernel: landmark_loss_forward.1
$region0: #{landmark_loss_forward.1}
  #allocation0 [shape = 'u32[]', space=smem, size = 0x4, offset = 0x4, fixed_abs, tag = 'smem constant byte address 0x4 - core index']
  #allocation1 [shape = 'u32[72,128]{1,0:T(1,128)}', space=vmem, size = 0x9000, scoped, tag = 'internal scratch']
  %s0 = inlined_call_operand.vmem [shape: f32[4,64], index: 0, kind: input, shape index: {}]
  %s1 = inlined_call_operand.hbm [shape: f32[64,384], index: 1, kind: input, shape index: {}]
  %s2 = inlined_call_operand.vmem [shape: f32[1,384], index: 2, kind: input, shape index: {}]
  %s3 = inlined_call_operand.hbm [shape: f32[1,1], index: 3, kind: output, shape index: {}]
  %s4 = sld [smem:[#allocation0]]
  $region26: #{landmark_loss_forward.1} parent=0
    _
  %s6 = ssub.s32 1, %s4
  %s7 = scalar_select 0, %s6, %s4
  $region1: #{landmark_loss_forward.1} parent=0
    #allocation2 [shape = 'u8[98304]{0}', space=vmem, size = 0x18000, scoped, tag = 'input window, operand 1, single buffered']
    #allocation3 [shape = 's32[1]{0}', space=sflag, size = 0x4, scoped, tag = 'scoped memory for landmark_loss_forward.1']
    #allocation4 [shape = 's32[1]{0}', space=sflag, size = 0x4, scoped, tag = 'scoped memory for landmark_loss_forward.1']
    #allocation5 [shape = 'u8[512]{0}', space=smem, size = 0x200, scoped, tag = 'output window, operand 0, single buffered']
    %8 = vsyncpa [#allocation3], 0
    %9 = vsyncpa [#allocation4], 0
    // Predicated region
    $region2: #{landmark_loss_forward.1} parent=1 // pred_check
      _
    $region3: #{landmark_loss_forward.1} parent=1 // pred_check_branch
      %11 = sbr.rel (0) target = $region5
    $region4: #{landmark_loss_forward.1} parent=1 // pred_region
      _
    $region5: #{landmark_loss_forward.1} parent=1 // pred_fallthru
      _
    // Predicated region
    $region6: #{landmark_loss_forward.1} parent=1 // pred_check
      _
    $region7: #{landmark_loss_forward.1} parent=1 // pred_check_branch
      %13 = sbr.rel (0) target = $region9
    $region8: #{landmark_loss_forward.1} parent=1 // pred_region
      %15 = vsyncadd [#allocation3], 0
      %s16 = sshll.u32 %s1, 4
      %s17 = int_to_ptr.hbm [resolvable:$true] %s16
      %s18 = sshll.u32 [#allocation2], 4
      %s19 = int_to_ptr.vmem [resolvable:$true] %s18
      %24 = dma.hbm_to_vmem [thread:$0]  %s17, 3072, %s19, [#allocation3], 384, 384, 24
    $region9: #{landmark_loss_forward.1} parent=1 // pred_fallthru
      _
    // Predicated region
    $region10: #{landmark_loss_forward.1} parent=1 // pred_check
      _
    $region11: #{landmark_loss_forward.1} parent=1 // pred_check_branch
      %26 = sbr.rel (0) target = $region13
    $region12: #{landmark_loss_forward.1} parent=1 // pred_region
      _
    $region13: #{landmark_loss_forward.1} parent=1 // pred_fallthru
      _
    // Predicated region
    $region14: #{landmark_loss_forward.1} parent=1 // pred_check
      _
    $region15: #{landmark_loss_forward.1} parent=1 // pred_check_branch
      %28 = sbr.rel (0) target = $region17
    $region16: #{landmark_loss_forward.1} parent=1 // pred_region
      %30 = dma.done [#allocation3], 3072
    $region17: #{landmark_loss_forward.1} parent=1 // pred_fallthru
      _
    %v31 = vld [vmem:[%s0] sm:$0xf]
    %v32 = vld [vmem:[#allocation2] sm:$0xff]
    %v33 = vld [vmem:[#allocation2 + $0x8] sm:$0xff]
    %v34 = vld [vmem:[#allocation2 + $0x10] sm:$0xff]
    %v35 = vld [vmem:[#allocation2 + $0x18] sm:$0xff]
    %v36 = vld [vmem:[#allocation2 + $0x20] sm:$0xff]
    %v37 = vld [vmem:[#allocation2 + $0x28] sm:$0xff]
    %v38 = vld [vmem:[#allocation2 + $0x30] sm:$0xff]
    %v39 = vld [vmem:[#allocation2 + $0x38] sm:$0xff]
    %v40 = vld [vmem:[#allocation2 + $0x40] sm:$0xff]
    %v41 = vld [vmem:[#allocation2 + $0x48] sm:$0xff]
    %v42 = vld [vmem:[#allocation2 + $0x50] sm:$0xff]
    %v43 = vld [vmem:[#allocation2 + $0x58] sm:$0xff]
    %v44 = vld [vmem:[#allocation2 + $0x60] sm:$0xff]
    %v45 = vld [vmem:[#allocation2 + $0x68] sm:$0xff]
    %v46 = vld [vmem:[#allocation2 + $0x70] sm:$0xff]
    %v47 = vld [vmem:[#allocation2 + $0x78] sm:$0xff]
    %v48 = vld [vmem:[#allocation2 + $0x80] sm:$0xff]
    %v49 = vld [vmem:[#allocation2 + $0x88] sm:$0xff]
    %v50 = vld [vmem:[#allocation2 + $0x90] sm:$0xff]
    %v51 = vld [vmem:[#allocation2 + $0x98] sm:$0xff]
    %v52 = vld [vmem:[#allocation2 + $0xa0] sm:$0xff]
    %v53 = vld [vmem:[#allocation2 + $0xa8] sm:$0xff]
    %v54 = vld [vmem:[#allocation2 + $0xb0] sm:$0xff]
    %v55 = vld [vmem:[#allocation2 + $0xb8] sm:$0xff]
    %v56 = vld [vmem:[%s2] sm:$0x7]
    %v58 = vperm.slane %v56, 0
    %v59 = vperm.slane %v56, 1
    %v60 = vperm.slane %v56, 2
    %vm64 = vcmask 523264
    %v66 = vsel %vm64, %v31, 0
    %68 = vmatpush.msra.mxu0 0.0
    %69 = vmatpush.msra.mxu0 0.0
    %70 = vmatpush.msra.mxu0 0.0
    %71 = vmatpush.msra.mxu0 0.0
    %72 = vmatpush.msra.mxu0 0.0
    %73 = vmatpush.msra.mxu0 0.0
    %74 = vmatpush.msra.mxu0 0.0
    %75 = vmatpush.msra.mxu0 0.0
    %76 = vmatpush.msra.mxu0 %v53
    %77 = vmatpush.msra.mxu0 %v50
    %78 = vmatpush.msra.mxu0 %v47
    %79 = vmatpush.msra.mxu0 %v44
    %80 = vmatpush.msra.mxu0 %v41
    %81 = vmatpush.msra.mxu0 %v38
    %82 = vmatpush.msra.mxu0 %v35
    %83 = vmatpush.msra.mxu0 %v32
    %84 = vmatmul.f32.gmra.mxu0 %v66
    %v85 = vpop.f32.mrf.mxu0
    %v86 = vadd.f32 %v58, %v85
    %87 = vdwg.mxu0
    %88 = vmatpush.msra.mxu0 0.0
    %89 = vmatpush.msra.mxu0 0.0
    %90 = vmatpush.msra.mxu0 0.0
    %91 = vmatpush.msra.mxu0 0.0
    %92 = vmatpush.msra.mxu0 0.0
    %93 = vmatpush.msra.mxu0 0.0
    %94 = vmatpush.msra.mxu0 0.0
    %95 = vmatpush.msra.mxu0 0.0
    %96 = vmatpush.msra.mxu0 %v54
    %97 = vmatpush.msra.mxu0 %v51
    %98 = vmatpush.msra.mxu0 %v48
    %99 = vmatpush.msra.mxu0 %v45
    %100 = vmatpush.msra.mxu0 %v42
    %101 = vmatpush.msra.mxu0 %v39
    %102 = vmatpush.msra.mxu0 %v36
    %103 = vmatpush.msra.mxu0 %v33
    %104 = vmatmul.f32.gmra.mxu0 %v66
    %v105 = vpop.f32.mrf.mxu0
    %v106 = vadd.f32 %v59, %v105
    %107 = vdwg.mxu0
    %108 = vmatpush.msra.mxu0 0.0
    %109 = vmatpush.msra.mxu0 0.0
    %110 = vmatpush.msra.mxu0 0.0
    %111 = vmatpush.msra.mxu0 0.0
    %112 = vmatpush.msra.mxu0 0.0
    %113 = vmatpush.msra.mxu0 0.0
    %114 = vmatpush.msra.mxu0 0.0
    %115 = vmatpush.msra.mxu0 0.0
    %116 = vmatpush.msra.mxu0 %v55
    %117 = vmatpush.msra.mxu0 %v52
    %118 = vmatpush.msra.mxu0 %v49
    %119 = vmatpush.msra.mxu0 %v46
    %120 = vmatpush.msra.mxu0 %v43
    %121 = vmatpush.msra.mxu0 %v40
    %122 = vmatpush.msra.mxu0 %v37
    %123 = vmatpush.msra.mxu0 %v34
    %124 = vmatmul.f32.gmra.mxu0 %v66
    %v125 = vpop.f32.mrf.mxu0
    %v126 = vadd.f32 %v60, %v125
    %127 = vdwg.mxu0
    %v128 = vsub.f32 10.0, %v126
    %v129 = vrcp.pop %v128
    %v130 = vmul.f32 %v86, %v129
    %v131 = vmul.f32 %v106, %v129
    %v133 = vrot.slane %v130, 2
    %v135 = vsub.f32 %v130, %v133
    %v137 = vrot.slane %v131, 2
    %v139 = vsub.f32 %v131, %v137
    %v140 = vmul.f32 %v135, %v135
    %v141 = vmul.f32 %v139, %v139
    %v142 = vadd.f32 %v140, %v141
    %v143 = vlaneseq
    %v144 = vand.u32 %v143, 127
    %vm145 = vcmp.lt.s32.totalorder %v144, 48
    %vm146 = vcmp.lt.s32.totalorder %v144, 68
    %v147 = vsel %vm146, 189.38074, 0.0
    %v148 = vsel %vm145, 1578.1727, %v147
    %v149 = vmul.f32 %v142, %v148
    %vm150 = vcmask 1041408
    %v151 = vsel %vm150, %v149, 0.0
    %152 = vadd.xlane.f32.xlu0 %v151
    %v153 = vpop.xlane.xlu0 %152
    %v154 = vrot.slane %v153, 4
    %v155 = vadd.f32 %v153, %v154
    %v156 = vrot.slane %v155, 2
    %v157 = vadd.f32 %v155, %v156
    %v158 = vrot.slane %v157, 1
    %v159 = vadd.f32 %v157, %v158
    %s160 = vtos %v159
    %s161 = scalar_lea.smem [#allocation5], 0
    %162 = sst [smem:[%s161]] %s160
    // Predicated region
    $region18: #{landmark_loss_forward.1} parent=1 // pred_check
      _
    $region19: #{landmark_loss_forward.1} parent=1 // pred_check_branch
      %164 = sbr.rel (0) target = $region21
    $region20: #{landmark_loss_forward.1} parent=1 // pred_region
      %166 = vsyncadd [#allocation4], 0
      %s168 = sshll.u32 %s3, 4
      %s169 = int_to_ptr.hbm [resolvable:$true] %s168
      %171 = dma.smem_to_hbm [#allocation5], 16, %s169, [#allocation4]
    $region21: #{landmark_loss_forward.1} parent=1 // pred_fallthru
      _
    // Predicated region
    $region22: #{landmark_loss_forward.1} parent=1 // pred_check
      _
    $region23: #{landmark_loss_forward.1} parent=1 // pred_check_branch
      %173 = sbr.rel (0) target = $region25
    $region24: #{landmark_loss_forward.1} parent=1 // pred_region
      %175 = dma.done [#allocation4], 16
    $region25: #{landmark_loss_forward.1} parent=1 // pred_fallthru
      _
    %176 = sfence
    %177 = vsyncpa [#allocation3], 1
    %178 = vsyncpa [#allocation4], 1

</llo_original>
